<compile_context>
chip_gen: v7x
topology: tpu7x:2x2x1
jax: 0.10.0
libtpu: 0.0.40
codegen_flags: <defaults>
</compile_context>

<pallas_src>
import functools

import jax
import jax.numpy as jnp
from jax.experimental import pallas as pl
from jax.experimental.pallas import tpu as pltpu


def _feature_merge_kernel(ids_ref, x2_ref, ctx_tbl_ref, w2_ref, b2_ref, o_ref):
    """One grid step handles tm nodes packed as tm2 = tm/2 lane-dense rows.

    ids_ref    : (tm2, 2)     int32  -- batch id of the (even, odd) node per row
    x2_ref     : (tm2, 2*Ci)  f32    -- two nodes per row (cast to bf16 in-kernel)
    ctx_tbl_ref: (2*BT, 2*Co) bf16   -- row g = [ctx[g] | 0], row BT+g = [0 | ctx[g]]
    w2_ref     : (2*Ci, 2*Co) bf16   -- block-diag([Wx', Wx']), BN scale folded in
    b2_ref     : (1, 2*Co)    f32    -- [bias' | bias']
    o_ref      : (tm2, 2*Co)  out_dtype
    """
    # ---- node MLP: bf16 MXU matmul, f32 accumulation & elementwise ----
    x_bf = x2_ref[...].astype(jnp.bfloat16)          # in-kernel cast (VPU convert)
    z = jnp.dot(x_bf, w2_ref[...], preferred_element_type=jnp.float32)
    z = z + b2_ref[...]
    # SiLU: z * sigmoid(z); exp and approx-reciprocal both land on the EUP slot.
    z = z * pl.reciprocal(1.0 + jnp.exp(-z), approx=True)

    # ---- ctx[batch] gather as a tiny one-hot MXU matmul (O(1) in B) ----
    tm2 = o_ref.shape[0]
    nb2 = ctx_tbl_ref.shape[0]
    bt = nb2 // 2
    ids = ids_ref[...]                                # (tm2, 2) int32
    gid = jax.lax.broadcasted_iota(jnp.int32, (tm2, nb2), 1)
    left = gid < bt
    sel = (left & (gid == ids[:, 0:1])) | (
        jnp.logical_not(left) & ((gid - bt) == ids[:, 1:2]))
    onehot = jnp.where(sel, jnp.float32(1.0), jnp.float32(0.0)).astype(jnp.bfloat16)
    ctx_g = jnp.dot(onehot, ctx_tbl_ref[...], preferred_element_type=jnp.float32)

    o_ref[...] = (z + ctx_g).astype(o_ref.dtype)


@functools.partial(jax.jit, static_argnames=("tm",))
def feature_merge(x, batch, ctx, wx, xscale, xbias, wc, cscale, cbias, *, tm=4096):
    """x: [N, Ci] nodes, batch: [N] graph ids in [0, B), ctx: [B, Cc] context."""
    n, ci = x.shape
    b = ctx.shape[0]
    co = wx.shape[1]
    out_dtype = x.dtype

    # Keep >= 4 grid steps for small N so the "parallel" axis actually shards
    # across both TensorCores on v7x; tm stays a multiple of 32 throughout.
    while tm > 256 and tm % 64 == 0 and pl.cdiv(n, tm) < 4:
        tm //= 2
    if tm % 32:
        raise ValueError("tm must be a multiple of 32")

    # ---- hoisted ctx MLP (tiny [B,Cc]@[Cc,Co]) in plain XLA, f32, BN folded ----
    wc_f = wc.astype(jnp.float32) * cscale.astype(jnp.float32)[None, :]
    zc = jnp.dot(ctx.astype(jnp.float32), wc_f,
                 preferred_element_type=jnp.float32) + cbias[None, :]
    ctx_act = zc * jax.nn.sigmoid(zc)                               # (B, Co) f32

    # Staged ctx table for the one-hot gather matmul; pad B up to a multiple of
    # 8 so the bf16 table is a clean (16, 2*Co) tile (padding rows are zero and
    # never selected, since real ids are < B).
    bt = ((b + 7) // 8) * 8
    ctx_bf = ctx_act.astype(jnp.bfloat16)
    ctx_tbl = (jnp.zeros((2 * bt, 2 * co), jnp.bfloat16)
               .at[:b, :co].set(ctx_bf)
               .at[bt:bt + b, co:].set(ctx_bf))                     # (2BT, 2Co)

    # ---- fold BN scale into node weights, pair-pack as block-diagonal bf16 ----
    wx_f = (wx.astype(jnp.float32) * xscale.astype(jnp.float32)[None, :]
            ).astype(jnp.bfloat16)                                  # (Ci, Co)
    z0 = jnp.zeros((ci, co), jnp.bfloat16)
    w2 = jnp.block([[wx_f, z0], [z0, wx_f]])                        # (2Ci, 2Co)
    b2 = jnp.concatenate([xbias, xbias]).astype(jnp.float32)[None, :]   # (1, 2Co)

    # ---- free (view-only) packing of nodes, two per lane-dense row ----
    # Only an odd N costs one small pad copy; ragged N vs tile size is handled
    # by the partial last grid block (OOB reads discarded on the masked write).
    if n % 2:
        x = jnp.pad(x, ((0, 1), (0, 0)))
        batch = jnp.pad(batch, (0, 1))
    n_even = x.shape[0]
    n2 = n_even // 2
    x2 = x.reshape(n2, 2 * ci)                                      # free reshape
    ids2 = batch.astype(jnp.int32).reshape(n2, 2)                   # free reshape

    tm2 = tm // 2
    out2 = pl.pallas_call(
        _feature_merge_kernel,
        out_shape=jax.ShapeDtypeStruct((n2, 2 * co), out_dtype),
        grid_spec=pltpu.PrefetchScalarGridSpec(
            num_scalar_prefetch=0,
            grid=(pl.cdiv(n2, tm2),),
            in_specs=[
                pl.BlockSpec((tm2, 2), lambda i: (i, 0)),           # packed batch ids
                pl.BlockSpec((tm2, 2 * ci), lambda i: (i, 0)),      # packed x tile
                pl.BlockSpec((2 * bt, 2 * co), lambda i: (0, 0)),   # staged ctx table
                pl.BlockSpec((2 * ci, 2 * co), lambda i: (0, 0)),   # block-diag weights
                pl.BlockSpec((1, 2 * co), lambda i: (0, 0)),        # fused bias
            ],
            out_specs=pl.BlockSpec((tm2, 2 * co), lambda i: (i, 0)),
        ),
        # Independent node tiles -> parallel (megacore sharding on v7x).
        # Per-step VMEM (double-buffered x/ids/out tiles + resident weights/ctx)
        # is a few MiB even at tm=4096, well under the default scoped limit on
        # v5e/v6e/v7x; set vmem_limit_bytes only if tm is pushed past ~16K.
        compiler_params=pltpu.CompilerParams(
            dimension_semantics=("parallel",)),
    )(ids2, x2, ctx_tbl, w2, b2)

    out = out2.reshape(n_even, co)                                  # free reshape
    if n_even != n:
        out = out[:n]
    return out


def _reference(x, batch, ctx, wx, xscale, xbias, wc, cscale, cbias):
    silu = lambda z: z * jax.nn.sigmoid(z)
    c = silu(ctx @ (wc * cscale[None, :]) + cbias[None, :])
    c = c[batch]
    # match the kernel's bf16 rounding of x and the folded weights
    xb = x.astype(jnp.bfloat16).astype(jnp.float32)
    wb = (wx * xscale[None, :]).astype(jnp.bfloat16).astype(jnp.float32)
    y = silu(xb @ wb + xbias[None, :])
    return y + c


if __name__ == "__main__":
    # small, module-consistent shapes (N not a multiple of the tile -> ragged path)
    N, B = 1000, 4                 # nodes, graphs
    IN_CH, CTX_CH, OUT_CH = 32, 16, 64

    key = jax.random.PRNGKey(0)
    kx, kc, kwx, kwc, kb, kbx, kbc = jax.random.split(key, 7)

    x = jax.random.normal(kx, (N, IN_CH), dtype=jnp.float32)
    ctx = jax.random.normal(kc, (B, CTX_CH), dtype=jnp.float32)
    batch = jax.random.randint(kb, (N,), 0, B, dtype=jnp.int32)

    wx = jax.random.normal(kwx, (IN_CH, OUT_CH), dtype=jnp.float32) * 0.1
    wc = jax.random.normal(kwc, (CTX_CH, OUT_CH), dtype=jnp.float32) * 0.1
    bx = jax.random.normal(kbx, (OUT_CH,), dtype=jnp.float32) * 0.05
    bc = jax.random.normal(kbc, (OUT_CH,), dtype=jnp.float32) * 0.05

    # eval-mode BatchNorm params, folded to per-channel scale/shift
    eps = 1e-5
    gamma_x = jnp.linspace(0.8, 1.2, OUT_CH, dtype=jnp.float32)
    beta_x = jnp.linspace(-0.1, 0.1, OUT_CH, dtype=jnp.float32)
    mean_x = jnp.zeros((OUT_CH,), jnp.float32)
    var_x = jnp.ones((OUT_CH,), jnp.float32)
    gamma_c = jnp.linspace(1.1, 0.9, OUT_CH, dtype=jnp.float32)
    beta_c = jnp.linspace(0.05, -0.05, OUT_CH, dtype=jnp.float32)
    mean_c = jnp.zeros((OUT_CH,), jnp.float32)
    var_c = jnp.ones((OUT_CH,), jnp.float32)

    xscale = gamma_x / jnp.sqrt(var_x + eps)
    xbias = (bx - mean_x) * xscale + beta_x
    cscale = gamma_c / jnp.sqrt(var_c + eps)
    cbias = (bc - mean_c) * cscale + beta_c

    out = feature_merge(x, batch, ctx, wx, xscale, xbias, wc, cscale, cbias)
    out = jax.block_until_ready(out)

    ref = _reference(x, batch, ctx, wx, xscale, xbias, wc, cscale, cbias)
    assert out.shape == (N, OUT_CH)
    assert out.dtype == x.dtype
    assert jnp.allclose(out, ref, atol=1e-2, rtol=1e-2), \
        float(jnp.max(jnp.abs(out - ref)))

    print("KERNEL_OK")
</pallas_src>

<mosaic_0001>
module attributes {stable_mosaic.version = 11 : i64} {
  func.func @_feature_merge_kernel(%arg0: i32, %arg1: memref<128x2xi32, #tpu.memory_space<vmem>>, %arg2: memref<128x64xf32, #tpu.memory_space<vmem>>, %arg3: memref<16x128xbf16, #tpu.memory_space<vmem>>, %arg4: memref<64x128xbf16, #tpu.memory_space<vmem>>, %arg5: memref<1x128xf32, #tpu.memory_space<vmem>>, %arg6: memref<128x128xf32, #tpu.memory_space<vmem>>) attributes {dimension_semantics = [#tpu.dimension_semantics<parallel>], iteration_bounds = array<i64: 4>, scalar_prefetch = 0 : i64, scratch_operands = 0 : i64, tpu.core_type = #tpu.core_type<tc>, window_params = [{transform_indices = @transform_0, window_bounds = array<i64: 128, 2>}, {transform_indices = @transform_1, window_bounds = array<i64: 128, 64>}, {pipeline_mode = #tpu.pipeline_mode<synchronous>, transform_indices = @transform_2, window_bounds = array<i64: 16, 128>}, {pipeline_mode = #tpu.pipeline_mode<synchronous>, transform_indices = @transform_3, window_bounds = array<i64: 64, 128>}, {pipeline_mode = #tpu.pipeline_mode<synchronous>, transform_indices = @transform_4, window_bounds = array<i64: 1, 128>}, {transform_indices = @transform_5, window_bounds = array<i64: 128, 128>}]} {
    %c0 = arith.constant 0 : index
    %c0_0 = arith.constant 0 : index
    %0 = vector.load %arg2[%c0, %c0_0] : memref<128x64xf32, #tpu.memory_space<vmem>>, vector<128x64xf32>
    %1 = arith.truncf %0 : vector<128x64xf32> to vector<128x64xbf16>
    %c0_1 = arith.constant 0 : index
    %c0_2 = arith.constant 0 : index
    %2 = vector.load %arg4[%c0_1, %c0_2] : memref<64x128xbf16, #tpu.memory_space<vmem>>, vector<64x128xbf16>
    %cst = arith.constant dense<0.000000e+00> : vector<128x128xf32>
    %3 = tpu.matmul %1, %2, %cst {dimension_numbers = #tpu.dot_dimension_numbers<[1], [0], [0], [1], [0, 0, 1, 1], [], []>} : vector<128x64xbf16>, vector<64x128xbf16>, vector<128x128xf32> -> vector<128x128xf32>
    %c0_3 = arith.constant 0 : index
    %c0_4 = arith.constant 0 : index
    %4 = vector.load %arg5[%c0_3, %c0_4] : memref<1x128xf32, #tpu.memory_space<vmem>>, vector<1x128xf32>
    %5 = vector.broadcast %4 : vector<1x128xf32> to vector<128x128xf32>
    %6 = arith.addf %3, %5 : vector<128x128xf32>
    %cst_5 = arith.constant 0.000000e+00 : f32
    %7 = vector.broadcast %cst_5 : f32 to vector<128x128xf32>
    %8 = arith.subf %7, %6 : vector<128x128xf32>
    %9 = math.exp %8 : vector<128x128xf32>
    %cst_6 = arith.constant 1.000000e+00 : f32
    %10 = vector.broadcast %cst_6 : f32 to vector<128x128xf32>
    %11 = arith.addf %10, %9 : vector<128x128xf32>
    %12 = tpu.reciprocal %11 {approx = true} : vector<128x128xf32> -> vector<128x128xf32>
    %13 = arith.mulf %6, %12 : vector<128x128xf32>
    %c0_7 = arith.constant 0 : index
    %c0_8 = arith.constant 0 : index
    %14 = vector.load %arg1[%c0_7, %c0_8] : memref<128x2xi32, #tpu.memory_space<vmem>>, vector<128x2xi32>
    %15 = tpu.iota {dimensions = array<i32: 1>} : vector<128x16xi32>
    %c8_i32 = arith.constant 8 : i32
    %16 = vector.broadcast %c8_i32 : i32 to vector<128x16xi32>
    %17 = arith.cmpi slt, %15, %16 : vector<128x16xi32>
    %18 = vector.extract_strided_slice %14 {offsets = [0, 0], sizes = [128, 1], strides = [1, 1]} : vector<128x2xi32> to vector<128x1xi32>
    %19 = vector.broadcast %18 : vector<128x1xi32> to vector<128x16xi32>
    %20 = arith.cmpi eq, %15, %19 : vector<128x16xi32>
    %21 = arith.andi %17, %20 : vector<128x16xi1>
    %cst_9 = arith.constant dense<true> : vector<128x16xi1>
    %22 = arith.xori %17, %cst_9 : vector<128x16xi1>
    %c8_i32_10 = arith.constant 8 : i32
    %23 = vector.broadcast %c8_i32_10 : i32 to vector<128x16xi32>
    %24 = arith.subi %15, %23 : vector<128x16xi32>
    %25 = vector.extract_strided_slice %14 {offsets = [0, 1], sizes = [128, 1], strides = [1, 1]} : vector<128x2xi32> to vector<128x1xi32>
    %26 = vector.broadcast %25 : vector<128x1xi32> to vector<128x16xi32>
    %27 = arith.cmpi eq, %24, %26 : vector<128x16xi32>
    %28 = arith.andi %22, %27 : vector<128x16xi1>
    %29 = arith.ori %21, %28 : vector<128x16xi1>
    %cst_11 = arith.constant 1.000000e+00 : f32
    %cst_12 = arith.constant 0.000000e+00 : f32
    %30 = vector.broadcast %cst_11 : f32 to vector<128x16xf32>
    %31 = vector.broadcast %cst_12 : f32 to vector<128x16xf32>
    %32 = arith.select %29, %30, %31 : vector<128x16xi1>, vector<128x16xf32>
    %33 = arith.truncf %32 : vector<128x16xf32> to vector<128x16xbf16>
    %c0_13 = arith.constant 0 : index
    %c0_14 = arith.constant 0 : index
    %34 = vector.load %arg3[%c0_13, %c0_14] : memref<16x128xbf16, #tpu.memory_space<vmem>>, vector<16x128xbf16>
    %cst_15 = arith.constant dense<0.000000e+00> : vector<128x128xf32>
    %35 = tpu.matmul %33, %34, %cst_15 {dimension_numbers = #tpu.dot_dimension_numbers<[1], [0], [0], [1], [0, 0, 1, 1], [], []>} : vector<128x16xbf16>, vector<16x128xbf16>, vector<128x128xf32> -> vector<128x128xf32>
    %36 = arith.addf %13, %35 : vector<128x128xf32>
    %c0_16 = arith.constant 0 : index
    %c0_17 = arith.constant 0 : index
    %37 = vector.load %arg6[%c0_16, %c0_17] : memref<128x128xf32, #tpu.memory_space<vmem>>, vector<128x128xf32>
    tpu.vector_store %arg6[%c0_16, %c0_17], %36 {strides = array<i32>} : memref<128x128xf32, #tpu.memory_space<vmem>>, vector<128x128xf32>,
    return
  }
  func.func @transform_0(%arg0: i32) -> (i32, i32) {
    %c0_i32 = arith.constant 0 : i32
    %c0_i32_0 = arith.constant 0 : i32
    return %arg0, %c0_i32 : i32, i32
  }
  func.func @transform_1(%arg0: i32) -> (i32, i32) {
    %c0_i32 = arith.constant 0 : i32
    %c0_i32_0 = arith.constant 0 : i32
    return %arg0, %c0_i32 : i32, i32
  }
  func.func @transform_2(%arg0: i32) -> (i32, i32) {
    %c0_i32 = arith.constant 0 : i32
    %c0_i32_0 = arith.constant 0 : i32
    %c0_i32_1 = arith.constant 0 : i32
    return %c0_i32, %c0_i32_0 : i32, i32
  }
  func.func @transform_3(%arg0: i32) -> (i32, i32) {
    %c0_i32 = arith.constant 0 : i32
    %c0_i32_0 = arith.constant 0 : i32
    %c0_i32_1 = arith.constant 0 : i32
    return %c0_i32, %c0_i32_0 : i32, i32
  }
  func.func @transform_4(%arg0: i32) -> (i32, i32) {
    %c0_i32 = arith.constant 0 : i32
    %c0_i32_0 = arith.constant 0 : i32
    %c0_i32_1 = arith.constant 0 : i32
    return %c0_i32, %c0_i32_0 : i32, i32
  }
  func.func @transform_5(%arg0: i32) -> (i32, i32) {
    %c0_i32 = arith.constant 0 : i32
    %c0_i32_0 = arith.constant 0 : i32
    return %arg0, %c0_i32 : i32, i32
  }
}

</mosaic_0001>

<llo_original>
// kernel: feature_merge.1
$region0: #{feature_merge.1}
  #allocation0 [shape = 'u32[]', space=smem, size = 0x4, offset = 0x4, fixed_abs, tag = 'smem constant byte address 0x4 - core index']
  #allocation1 [shape = 'u32[144,128]{1,0:T(1,128)}', space=vmem, size = 0x12000, scoped, tag = 'internal scratch']
  %s0 = inlined_call_operand.vmem [shape: s32[500,2], index: 0, kind: input, shape index: {}]
  %s1 = inlined_call_operand.vmem [shape: f32[500,64], index: 1, kind: input, shape index: {}]
  %s2 = inlined_call_operand.vmem [shape: bf16[16,128], index: 2, kind: input, shape index: {}]
  %s3 = inlined_call_operand.vmem [shape: bf16[64,128], index: 3, kind: input, shape index: {}]
  %s4 = inlined_call_operand.vmem [shape: f32[1,128], index: 4, kind: input, shape index: {}]
  %s5 = inlined_call_operand.vmem [shape: f32[500,128], index: 5, kind: output, shape index: {}]
  %s6 = sld [smem:[#allocation0]]
  $region101: #{feature_merge.1} parent=0
    _
  %s8 = ssub.s32 1, %s6
  %s9 = scalar_select 0, %s8, %s6
  $region1: #{feature_merge.1} parent=0
    #allocation2 [shape = 'u8[131072]{0}', space=vmem, size = 0x20000, scoped, tag = 'output window, operand 0']
    loop: start=0, step=1, limit=6
    $region2: #{feature_merge.1} parent=1 // loop_pre_header
      _
    $region3: #{feature_merge.1} parent=1 // loop_header
      %s11 = sphi 0, %s15
      %p12 = scmp.ge.s32.totalorder %s11, 6
      %s21 = sphi 0, %s23
      %s24 = sphi 0, %s21
      %s25 = sphi 0, %s24
      %s41 = sphi 0, %s25
      %s47 = sphi 0, %s49
      %s50 = sphi 0, %s47
      %s51 = sphi 0, %s50
      %s67 = sphi 0, %s51
      %s71 = sphi 0, %s71
      %s73 = sphi 0, %s71
      %s74 = sphi 0, %s73
      %s88 = sphi 0, %s74
      %s92 = sphi 0, %s92
      %s94 = sphi 0, %s92
      %s95 = sphi 0, %s94
      %s109 = sphi 0, %s95
      %s113 = sphi 0, %s113
      %s115 = sphi 0, %s113
      %s116 = sphi 0, %s115
      %s130 = sphi 0, %s116
      %s136 = sphi 0, %s138
      %s139 = sphi 0, %s136
      %s140 = sphi 0, %s139
      %s156 = sphi 0, %s140
    $region4: #{feature_merge.1} parent=1 // loop_header_branch
      %14 = sbr.rel (%p12) target = $region8
    $region5: #{feature_merge.1} parent=1 // loop_body
      %s16 = ssub.s32 %s11, 1
      %s17 = ssub.s32 %s11, 2
      %s18 = sadd.s32 %s11, 1
      %s19 = ssub.s32 %s11, %s18
      %p20 = scmp.eq.s32.totalorder %s19, 0
      %s22 = sadd.s32 %s21, 1
      %s23 = scalar_select %p20, %s21, %s22
      %p26 = pneg %p20
      %p27 = scmp.eq.s32.totalorder %s11, 3
      %p28 = por %p26, %p27
      %p29 = scmp.ne.s32.totalorder %s21, %s24
      %p30 = scmp.eq.s32.totalorder %s11, 0
      %p31 = por %p29, %p30
      %p32 = scmp.ne.s32.totalorder %s21, %s24
      %p33 = scmp.eq.s32.totalorder %s16, 3
      %p34 = por %p32, %p33
      %p35 = scmp.ne.s32.totalorder %s24, %s25
      %p36 = scmp.eq.s32.totalorder %s16, 0
      %p37 = por %p35, %p36
      %p38 = scmp.ne.s32.totalorder %s24, %s25
      %p39 = scmp.eq.s32.totalorder %s17, 3
      %p40 = por %p38, %p39
      %p42 = scmp.ne.s32.totalorder %s25, %s41
      %p43 = scmp.eq.s32.totalorder %s17, 0
      %p44 = por %p42, %p43
      %s45 = ssub.s32 %s11, %s18
      %p46 = scmp.eq.s32.totalorder %s45, 0
      %s48 = sadd.s32 %s47, 1
      %s49 = scalar_select %p46, %s47, %s48
      %p52 = pneg %p46
      %p53 = scmp.eq.s32.totalorder %s11, 3
      %p54 = por %p52, %p53
      %p55 = scmp.ne.s32.totalorder %s47, %s50
      %p56 = scmp.eq.s32.totalorder %s11, 0
      %p57 = por %p55, %p56
      %p58 = scmp.ne.s32.totalorder %s47, %s50
      %p59 = scmp.eq.s32.totalorder %s16, 3
      %p60 = por %p58, %p59
      %p61 = scmp.ne.s32.totalorder %s50, %s51
      %p62 = scmp.eq.s32.totalorder %s16, 0
      %p63 = por %p61, %p62
      %p64 = scmp.ne.s32.totalorder %s50, %s51
      %p65 = scmp.eq.s32.totalorder %s17, 3
      %p66 = por %p64, %p65
      %p68 = scmp.ne.s32.totalorder %s51, %s67
      %p69 = scmp.eq.s32.totalorder %s17, 0
      %p70 = por %p68, %p69
      %s72 = sadd.s32 %s71, 1
      %p75 = scmp.eq.s32.totalorder %s11, 3
      %p76 = scmp.ne.s32.totalorder %s71, %s73
      %p77 = scmp.eq.s32.totalorder %s11, 0
      %p78 = por %p76, %p77
      %p79 = scmp.ne.s32.totalorder %s71, %s73
      %p80 = scmp.eq.s32.totalorder %s16, 3
      %p81 = por %p79, %p80
      %p82 = scmp.ne.s32.totalorder %s73, %s74
      %p83 = scmp.eq.s32.totalorder %s16, 0
      %p84 = por %p82, %p83
      %p85 = scmp.ne.s32.totalorder %s73, %s74
      %p86 = scmp.eq.s32.totalorder %s17, 3
      %p87 = por %p85, %p86
      %p89 = scmp.ne.s32.totalorder %s74, %s88
      %p90 = scmp.eq.s32.totalorder %s17, 0
      %p91 = por %p89, %p90
      %s93 = sadd.s32 %s92, 1
      %p96 = scmp.eq.s32.totalorder %s11, 3
      %p97 = scmp.ne.s32.totalorder %s92, %s94
      %p98 = scmp.eq.s32.totalorder %s11, 0
      %p99 = por %p97, %p98
      %p100 = scmp.ne.s32.totalorder %s92, %s94
      %p101 = scmp.eq.s32.totalorder %s16, 3
      %p102 = por %p100, %p101
      %p103 = scmp.ne.s32.totalorder %s94, %s95
      %p104 = scmp.eq.s32.totalorder %s16, 0
      %p105 = por %p103, %p104
      %p106 = scmp.ne.s32.totalorder %s94, %s95
      %p107 = scmp.eq.s32.totalorder %s17, 3
      %p108 = por %p106, %p107
      %p110 = scmp.ne.s32.totalorder %s95, %s109
      %p111 = scmp.eq.s32.totalorder %s17, 0
      %p112 = por %p110, %p111
      %s114 = sadd.s32 %s113, 1
      %p117 = scmp.eq.s32.totalorder %s11, 3
      %p118 = scmp.ne.s32.totalorder %s113, %s115
      %p119 = scmp.eq.s32.totalorder %s11, 0
      %p120 = por %p118, %p119
      %p121 = scmp.ne.s32.totalorder %s113, %s115
      %p122 = scmp.eq.s32.totalorder %s16, 3
      %p123 = por %p121, %p122
      %p124 = scmp.ne.s32.totalorder %s115, %s116
      %p125 = scmp.eq.s32.totalorder %s16, 0
      %p126 = por %p124, %p125
      %p127 = scmp.ne.s32.totalorder %s115, %s116
      %p128 = scmp.eq.s32.totalorder %s17, 3
      %p129 = por %p127, %p128
      %p131 = scmp.ne.s32.totalorder %s116, %s130
      %p132 = scmp.eq.s32.totalorder %s17, 0
      %p133 = por %p131, %p132
      %s134 = ssub.s32 %s11, %s18
      %p135 = scmp.eq.s32.totalorder %s134, 0
      %s137 = sadd.s32 %s136, 1
      %s138 = scalar_select %p135, %s136, %s137
      %p141 = pneg %p135
      %p142 = scmp.eq.s32.totalorder %s11, 3
      %p143 = por %p141, %p142
      %p144 = scmp.ne.s32.totalorder %s136, %s139
      %p145 = scmp.eq.s32.totalorder %s11, 0
      %p146 = por %p144, %p145
      %p147 = scmp.ne.s32.totalorder %s136, %s139
      %p148 = scmp.eq.s32.totalorder %s16, 3
      %p149 = por %p147, %p148
      %p150 = scmp.ne.s32.totalorder %s139, %s140
      %p151 = scmp.eq.s32.totalorder %s16, 0
      %p152 = por %p150, %p151
      %p153 = scmp.ne.s32.totalorder %s139, %s140
      %p154 = scmp.eq.s32.totalorder %s17, 3
      %p155 = por %p153, %p154
      %p157 = scmp.ne.s32.totalorder %s140, %s156
      %p158 = scmp.eq.s32.totalorder %s17, 0
      %p159 = por %p157, %p158
      %p160 = scmp.le.s32.totalorder 1, %s11
      %p161 = scmp.lt.s32.totalorder %s11, 5
      %p162 = pnand %p160, %p161
      %p163 = pneg %p162
      // Predicated region
      $region9: #{feature_merge.1} parent=5 // pred_check
        _
      $region10: #{feature_merge.1} parent=5 // pred_check_branch
        %165 = sbr.rel (%p162) target = $region12
      $region11: #{feature_merge.1} parent=5 // pred_region
        %s166 = ssub.s32 %s11, 1
        // Predicated region
        $region13: #{feature_merge.1} parent=11 // pred_check
          %p167 = pneg %p84
        $region14: #{feature_merge.1} parent=11 // pred_check_branch
          %169 = sbr.rel (%p167) target = $region16
        $region15: #{feature_merge.1} parent=11 // pred_region
          _
        $region16: #{feature_merge.1} parent=11 // pred_fallthru
          _
        // Predicated region
        $region17: #{feature_merge.1} parent=11 // pred_check
          %p170 = pneg %p105
        $region18: #{feature_merge.1} parent=11 // pred_check_branch
          %172 = sbr.rel (%p170) target = $region20
        $region19: #{feature_merge.1} parent=11 // pred_region
          _
        $region20: #{feature_merge.1} parent=11 // pred_fallthru
          _
        // Predicated region
        $region21: #{feature_merge.1} parent=11 // pred_check
          %p173 = pneg %p126
        $region22: #{feature_merge.1} parent=11 // pred_check_branch
          %175 = sbr.rel (%p173) target = $region24
        $region23: #{feature_merge.1} parent=11 // pred_region
          _
        $region24: #{feature_merge.1} parent=11 // pred_fallthru
          _
      $region12: #{feature_merge.1} parent=5 // pred_fallthru
        _
      %p176 = scmp.lt.s32.totalorder %s11, 4
      // Predicated region
      $region25: #{feature_merge.1} parent=5 // pred_check
        %p177 = pneg %p176
      $region26: #{feature_merge.1} parent=5 // pred_check_branch
        %179 = sbr.rel (%p177) target = $region28
      $region27: #{feature_merge.1} parent=5 // pred_region
        // Predicated region
        $region29: #{feature_merge.1} parent=27 // pred_check
          %p180 = pneg %p31
        $region30: #{feature_merge.1} parent=27 // pred_check_branch
          %182 = sbr.rel (%p180) target = $region32
        $region31: #{feature_merge.1} parent=27 // pred_region
          %s183 = smul.u32 16, %s11
          %s184 = ssub.s32 63, %s183
          %p185 = scmp.lt.s32.totalorder %s184, 16
          %s186 = scalar_select %p185, %s184, 16
          %s187 = smul.u32 128, %s186
          %p188 = scmp.lt.s32.totalorder %s183, 62
          %s189 = scalar_select %p188, %s183, 62
          %s190 = smul.addr %s189, 8
          %s191 = scalar_lea.vmem %s0, %s190
          %s192 = smul.u32 16, %s11
          %s193 = ssub.s32 63, %s192
          %p194 = scmp.lt.s32.totalorder %s193, 16
          %s195 = scalar_select %p194, %s193, 16
          %s196 = smul.u32 128, %s195
        $region32: #{feature_merge.1} parent=27 // pred_fallthru
          _
        // Predicated region
        $region33: #{feature_merge.1} parent=27 // pred_check
          %p197 = pneg %p57
        $region34: #{feature_merge.1} parent=27 // pred_check_branch
          %199 = sbr.rel (%p197) target = $region36
        $region35: #{feature_merge.1} parent=27 // pred_region
          %s200 = smul.u32 16, %s11
          %s201 = ssub.s32 63, %s200
          %p202 = scmp.lt.s32.totalorder %s201, 16
          %s203 = scalar_select %p202, %s201, 16
          %s204 = smul.u32 128, %s203
          %p205 = scmp.lt.s32.totalorder %s200, 62
          %s206 = scalar_select %p205, %s200, 62
          %s207 = smul.addr %s206, 8
          %s208 = scalar_lea.vmem %s1, %s207
          %s209 = smul.u32 16, %s11
          %s210 = ssub.s32 63, %s209
          %p211 = scmp.lt.s32.totalorder %s210, 16
          %s212 = scalar_select %p211, %s210, 16
          %s213 = smul.u32 128, %s212
        $region36: #{feature_merge.1} parent=27 // pred_fallthru
          _
      $region28: #{feature_merge.1} parent=5 // pred_fallthru
        _
      %p214 = scmp.le.s32.totalorder 1, %s11
      %p215 = scmp.lt.s32.totalorder %s11, 5
      %p216 = pnand %p214, %p215
      %p217 = pneg %p216
      // Predicated region
      $region37: #{feature_merge.1} parent=5 // pred_check
        _
      $region38: #{feature_merge.1} parent=5 // pred_check_branch
        %219 = sbr.rel (%p216) target = $region40
      $region39: #{feature_merge.1} parent=5 // pred_region
        %s220 = ssub.s32 %s11, 1
        %s221 = smul.u32 16, %s16
        %s222 = ssub.s32 63, %s221
        %p223 = scmp.lt.s32.totalorder %s222, 16
        %s224 = scalar_select %p223, %s222, 16
        %s225 = smul.u32 128, %s224
        %p226 = scmp.lt.s32.totalorder %s221, 62
        %s227 = scalar_select %p226, %s221, 62
        %s228 = smul.addr %s227, 8
        %s229 = scalar_lea.vmem %s0, %s228
        %p230 = pneg %p37
        %p231 = pneg %p34
        %s232 = smul.u32 16, %s16
        %s233 = ssub.s32 63, %s232
        %p234 = scmp.lt.s32.totalorder %s233, 16
        %s235 = scalar_select %p234, %s233, 16
        %s236 = smul.u32 128, %s235
        %p237 = scmp.lt.s32.totalorder %s232, 62
        %s238 = scalar_select %p237, %s232, 62
        %s239 = smul.addr %s238, 8
        %s240 = scalar_lea.vmem %s1, %s239
        %p241 = pneg %p63
        %p242 = pneg %p60
        %p243 = pneg %p84
        %p244 = pneg %p81
        %p245 = pneg %p105
        %p246 = pneg %p102
        %p247 = pneg %p126
        %p248 = pneg %p123
        %p249 = pneg %p152
        %p250 = pneg %p149
        %s251 = sand.u32 %s139, 1
        %s252 = sand.u32 %s139, 1
        %s253 = smul.addr %s252, 128
        %s254 = scalar_lea.vmem [#allocation2], %s253
        %s255 = smul.u32 16, %s16
        %s256 = ssub.s32 63, %s255
        %p257 = scmp.lt.s32.totalorder %s256, 16
        %s258 = scalar_select %p257, %s256, 16
        %s259 = smul.u32 128, %s258
        %p260 = scmp.lt.s32.totalorder %s255, 62
        %s261 = scalar_select %p260, %s255, 62
        %s262 = smul.addr %s261, 8
        %s263 = scalar_lea.vmem %s0, %s262
        %s264 = smul.u32 16, %s16
        %s265 = ssub.s32 63, %s264
        %p266 = scmp.lt.s32.totalorder %s265, 16
        %s267 = scalar_select %p266, %s265, 16
        %s268 = smul.u32 128, %s267
        %s269 = smul.u32 16, %s16
        %s270 = ssub.s32 63, %s269
        %p271 = scmp.lt.s32.totalorder %s270, 16
        %s272 = scalar_select %p271, %s270, 16
        %s273 = smul.u32 128, %s272
        %p274 = scmp.lt.s32.totalorder %s269, 62
        %s275 = scalar_select %p274, %s269, 62
        %s276 = smul.addr %s275, 8
        %s277 = scalar_lea.vmem %s1, %s276
        %s278 = smul.u32 16, %s16
        %s279 = ssub.s32 63, %s278
        %p280 = scmp.lt.s32.totalorder %s279, 16
        %s281 = scalar_select %p280, %s279, 16
        %s282 = smul.u32 128, %s281
        %s283 = smul.u32 16, %s16
        %s284 = ssub.s32 63, %s283
        %p285 = scmp.lt.s32.totalorder %s284, 16
        %s286 = scalar_select %p285, %s284, 16
        %s287 = smul.u32 128, %s286
        %v289 = vld [vmem:[%s277] sm:$0xff]
        %v290 = vld [vmem:[%s277 + $0x8] sm:$0xff]
        %v291 = vld [vmem:[%s277 + $0x10] sm:$0xff]
        %v292 = vld [vmem:[%s277 + $0x18] sm:$0xff]
        %v293 = vld [vmem:[%s277 + $0x20] sm:$0xff]
        %v294 = vld [vmem:[%s277 + $0x28] sm:$0xff]
        %v295 = vld [vmem:[%s277 + $0x30] sm:$0xff]
        %v296 = vld [vmem:[%s277 + $0x38] sm:$0xff]
        %v297 = vld [vmem:[%s277 + $0x40] sm:$0xff]
        %v298 = vld [vmem:[%s277 + $0x48] sm:$0xff]
        %v299 = vld [vmem:[%s277 + $0x50] sm:$0xff]
        %v300 = vld [vmem:[%s277 + $0x58] sm:$0xff]
        %v301 = vld [vmem:[%s277 + $0x60] sm:$0xff]
        %v302 = vld [vmem:[%s277 + $0x68] sm:$0xff]
        %v303 = vld [vmem:[%s277 + $0x70] sm:$0xff]
        %v304 = vld [vmem:[%s277 + $0x78] sm:$0xff]
        %v305 = vpack.c.bf16 %v290, %v289
        %v306 = vpack.c.bf16 %v292, %v291
        %v307 = vpack.c.bf16 %v294, %v293
        %v308 = vpack.c.bf16 %v296, %v295
        %v309 = vpack.c.bf16 %v298, %v297
        %v310 = vpack.c.bf16 %v300, %v299
        %v311 = vpack.c.bf16 %v302, %v301
        %v312 = vpack.c.bf16 %v304, %v303
        %v313 = vld [vmem:[%s3] sm:$0xf]
        %v314 = vld [vmem:[%s3 + $0x4] sm:$0xf]
        %v315 = vld [vmem:[%s3 + $0x8] sm:$0xf]
        %v316 = vld [vmem:[%s3 + $0xc] sm:$0xf]
        %v317 = vld [vmem:[%s3 + $0x10] sm:$0xf]
        %v318 = vld [vmem:[%s3 + $0x14] sm:$0xf]
        %v319 = vld [vmem:[%s3 + $0x18] sm:$0xf]
        %v320 = vld [vmem:[%s3 + $0x1c] sm:$0xf]
        %v321 = vld [vmem:[%s4] sm:$0x1]
        %v323 = vlaneseq
        %v324 = vshrl.u32 %v323, 7
        %v325 = vsub.s32 0, %v324
        %v326 = vrot.slane %v321, %v325
        %v336 = vunpack.c.l.b16 %v313
        %v337 = vunpack.c.l.b16 %v314
        %v338 = vunpack.c.l.b16 %v315
        %v339 = vunpack.c.l.b16 %v316
        %v340 = vunpack.c.l.b16 %v317
        %v341 = vunpack.c.l.b16 %v318
        %v342 = vunpack.c.l.b16 %v319
        %v343 = vunpack.c.l.b16 %v320
        %v344 = vpack.c.b16 %v337, %v336
        %v345 = vpack.c.b16 %v339, %v338
        %v346 = vpack.c.b16 %v341, %v340
        %v347 = vpack.c.b16 %v343, %v342
        %vm352 = vcmask 523264
        %v354 = vsel %vm352, %v305, 0
        %v357 = vsel %vm352, %v306, 0
        %v360 = vsel %vm352, %v307, 0
        %v363 = vsel %vm352, %v308, 0
        %v366 = vsel %vm352, %v309, 0
        %v369 = vsel %vm352, %v310, 0
        %v372 = vsel %vm352, %v311, 0
        %v375 = vsel %vm352, %v312, 0
        %377 = vmatprep.subr.bf16.mxu0 0
        %378 = vmatpush1.bf16.msra.mxu0 %v344
        %379 = vmatprep.subr.bf16.mxu0 0
        %380 = vmatpush1.bf16.msra.mxu0 %v345
        %381 = vmatprep.subr.bf16.mxu0 0
        %382 = vmatpush1.bf16.msra.mxu0 %v346
        %383 = vmatprep.subr.bf16.mxu0 0
        %384 = vmatpush1.bf16.msra.mxu0 %v347
        %385 = vmatprep.subr.bf16.mxu0 0
        %386 = vmatpush1.bf16.msra.mxu0 0
        %387 = vmatprep.subr.bf16.mxu0 0
        %388 = vmatpush1.bf16.msra.mxu0 0
        %389 = vmatprep.subr.bf16.mxu0 0
        %390 = vmatpush1.bf16.msra.mxu0 0
        %391 = vmatprep.subr.bf16.mxu0 0
        %392 = vmatpush1.bf16.msra.mxu0 0
        %393 = vmatprep.subr.bf16.mxu0 0
        %394 = vmatpush1.bf16.msra.mxu0 0
        %395 = vmatprep.subr.bf16.mxu0 0
        %396 = vmatpush1.bf16.msra.mxu0 0
        %397 = vmatprep.subr.bf16.mxu0 0
        %398 = vmatpush1.bf16.msra.mxu0 0
        %399 = vmatprep.subr.bf16.mxu0 0
        %400 = vmatpush1.bf16.msra.mxu0 0
        %401 = vmatprep.subr.bf16.mxu0 0
        %402 = vmatpush1.bf16.msra.mxu0 0
        %403 = vmatprep.subr.bf16.mxu0 0
        %404 = vmatpush1.bf16.msra.mxu0 0
        %405 = vmatprep.subr.bf16.mxu0 0
        %406 = vmatpush1.bf16.msra.mxu0 0
        %407 = vmatprep.subr.bf16.mxu0 0
        %408 = vmatpush1.bf16.msra.mxu0 0
        %409 = vmatprep.mubr.bf16.mxu0 0
        %410 = vmatmul.mubr.bf16.gmra.mrb[0].mxu0 %v354
        %v411 = vpop.f32.mrb[0].mxu0
        %v412 = vadd.f32 %v326, %v411
        %v413 = vpop.f32.mrb[0].mxu0
        %v414 = vpop.f32.mrb[0].mxu0
        %v415 = vadd.f32 %v326, %v414
        %v416 = vpop.f32.mrb[0].mxu0
        %417 = vmatprep.mubr.bf16.mxu0 0
        %418 = vmatmul.mubr.bf16.gmra.mrb[0].mxu0 %v357
        %v419 = vpop.f32.mrb[0].mxu0
        %v420 = vadd.f32 %v326, %v419
        %v421 = vpop.f32.mrb[0].mxu0
        %v422 = vpop.f32.mrb[0].mxu0
        %v423 = vadd.f32 %v326, %v422
        %v424 = vpop.f32.mrb[0].mxu0
        %425 = vmatprep.mubr.bf16.mxu0 0
        %426 = vmatmul.mubr.bf16.gmra.mrb[0].mxu0 %v360
        %v427 = vpop.f32.mrb[0].mxu0
        %v428 = vadd.f32 %v326, %v427
        %v429 = vpop.f32.mrb[0].mxu0
        %v430 = vpop.f32.mrb[0].mxu0
        %v431 = vadd.f32 %v326, %v430
        %v432 = vpop.f32.mrb[0].mxu0
        %433 = vmatprep.mubr.bf16.mxu0 0
        %434 = vmatmul.mubr.bf16.gmra.mrb[0].mxu0 %v363
        %v435 = vpop.f32.mrb[0].mxu0
        %v436 = vadd.f32 %v326, %v435
        %v437 = vpop.f32.mrb[0].mxu0
        %v438 = vpop.f32.mrb[0].mxu0
        %v439 = vadd.f32 %v326, %v438
        %v440 = vpop.f32.mrb[0].mxu0
        %441 = vmatprep.mubr.bf16.mxu0 0
        %442 = vmatmul.mubr.bf16.gmra.mrb[0].mxu0 %v366
        %v443 = vpop.f32.mrb[0].mxu0
        %v444 = vadd.f32 %v326, %v443
        %v445 = vpop.f32.mrb[0].mxu0
        %v446 = vpop.f32.mrb[0].mxu0
        %v447 = vadd.f32 %v326, %v446
        %v448 = vpop.f32.mrb[0].mxu0
        %449 = vmatprep.mubr.bf16.mxu0 0
        %450 = vmatmul.mubr.bf16.gmra.mrb[0].mxu0 %v369
        %v451 = vpop.f32.mrb[0].mxu0
        %v452 = vadd.f32 %v326, %v451
        %v453 = vpop.f32.mrb[0].mxu0
        %v454 = vpop.f32.mrb[0].mxu0
        %v455 = vadd.f32 %v326, %v454
        %v456 = vpop.f32.mrb[0].mxu0
        %457 = vmatprep.mubr.bf16.mxu0 0
        %458 = vmatmul.mubr.bf16.gmra.mrb[0].mxu0 %v372
        %v459 = vpop.f32.mrb[0].mxu0
        %v460 = vadd.f32 %v326, %v459
        %v461 = vpop.f32.mrb[0].mxu0
        %v462 = vpop.f32.mrb[0].mxu0
        %v463 = vadd.f32 %v326, %v462
        %v464 = vpop.f32.mrb[0].mxu0
        %465 = vmatprep.mubr.bf16.mxu0 0
        %466 = vmatmul.mubr.bf16.gmra.mrb[0].mxu0 %v375
        %v467 = vpop.f32.mrb[0].mxu0
        %v468 = vadd.f32 %v326, %v467
        %v469 = vpop.f32.mrb[0].mxu0
        %v470 = vpop.f32.mrb[0].mxu0
        %v471 = vadd.f32 %v326, %v470
        %v472 = vpop.f32.mrb[0].mxu0
        %473 = vdwg.mxu0
        %v474 = vsub.f32 0.0, %v412
        %v475 = vsub.f32 0.0, %v415
        %v476 = vsub.f32 0.0, %v420
        %v477 = vsub.f32 0.0, %v423
        %v478 = vsub.f32 0.0, %v428
        %v479 = vsub.f32 0.0, %v431
        %v480 = vsub.f32 0.0, %v436
        %v481 = vsub.f32 0.0, %v439
        %v482 = vsub.f32 0.0, %v444
        %v483 = vsub.f32 0.0, %v447
        %v484 = vsub.f32 0.0, %v452
        %v485 = vsub.f32 0.0, %v455
        %v486 = vsub.f32 0.0, %v460
        %v487 = vsub.f32 0.0, %v463
        %v488 = vsub.f32 0.0, %v468
        %v489 = vsub.f32 0.0, %v471
        %v490 = vmul.f32 %v474, 1.442695
        %v491 = vpow.pop %v490
        %v492 = vmul.f32 %v475, 1.442695
        %v493 = vpow.pop %v492
        %v494 = vmul.f32 %v476, 1.442695
        %v495 = vpow.pop %v494
        %v496 = vmul.f32 %v477, 1.442695
        %v497 = vpow.pop %v496
        %v498 = vmul.f32 %v478, 1.442695
        %v499 = vpow.pop %v498
        %v500 = vmul.f32 %v479, 1.442695
        %v501 = vpow.pop %v500
        %v502 = vmul.f32 %v480, 1.442695
        %v503 = vpow.pop %v502
        %v504 = vmul.f32 %v481, 1.442695
        %v505 = vpow.pop %v504
        %v506 = vmul.f32 %v482, 1.442695
        %v507 = vpow.pop %v506
        %v508 = vmul.f32 %v483, 1.442695
        %v509 = vpow.pop %v508
        %v510 = vmul.f32 %v484, 1.442695
        %v511 = vpow.pop %v510
        %v512 = vmul.f32 %v485, 1.442695
        %v513 = vpow.pop %v512
        %v514 = vmul.f32 %v486, 1.442695
        %v515 = vpow.pop %v514
        %v516 = vmul.f32 %v487, 1.442695
        %v517 = vpow.pop %v516
        %v518 = vmul.f32 %v488, 1.442695
        %v519 = vpow.pop %v518
        %v520 = vmul.f32 %v489, 1.442695
        %v521 = vpow.pop %v520
        %v522 = vadd.f32 %v491, 1.0
        %v523 = vadd.f32 %v493, 1.0
        %v524 = vadd.f32 %v495, 1.0
        %v525 = vadd.f32 %v497, 1.0
        %v526 = vadd.f32 %v499, 1.0
        %v527 = vadd.f32 %v501, 1.0
        %v528 = vadd.f32 %v503, 1.0
        %v529 = vadd.f32 %v505, 1.0
        %v530 = vadd.f32 %v507, 1.0
        %v531 = vadd.f32 %v509, 1.0
        %v532 = vadd.f32 %v511, 1.0
        %v533 = vadd.f32 %v513, 1.0
        %v534 = vadd.f32 %v515, 1.0
        %v535 = vadd.f32 %v517, 1.0
        %v536 = vadd.f32 %v519, 1.0
        %v537 = vadd.f32 %v521, 1.0
        %v538 = vrcp.pop %v522
        %v539 = vrcp.pop %v523
        %v540 = vrcp.pop %v524
        %v541 = vrcp.pop %v525
        %v542 = vrcp.pop %v526
        %v543 = vrcp.pop %v527
        %v544 = vrcp.pop %v528
        %v545 = vrcp.pop %v529
        %v546 = vrcp.pop %v530
        %v547 = vrcp.pop %v531
        %v548 = vrcp.pop %v532
        %v549 = vrcp.pop %v533
        %v550 = vrcp.pop %v534
        %v551 = vrcp.pop %v535
        %v552 = vrcp.pop %v536
        %v553 = vrcp.pop %v537
        %v554 = vmul.f32 %v412, %v538
        %v555 = vmul.f32 %v415, %v539
        %v556 = vmul.f32 %v420, %v540
        %v557 = vmul.f32 %v423, %v541
        %v558 = vmul.f32 %v428, %v542
        %v559 = vmul.f32 %v431, %v543
        %v560 = vmul.f32 %v436, %v544
        %v561 = vmul.f32 %v439, %v545
        %v562 = vmul.f32 %v444, %v546
        %v563 = vmul.f32 %v447, %v547
        %v564 = vmul.f32 %v452, %v548
        %v565 = vmul.f32 %v455, %v549
        %v566 = vmul.f32 %v460, %v550
        %v567 = vmul.f32 %v463, %v551
        %v568 = vmul.f32 %v468, %v552
        %v569 = vmul.f32 %v471, %v553
        %v570 = vld [vmem:[%s263] sm:$0xff]
        %v571 = vld [vmem:[%s263 + $0x8] sm:$0xff]
        %v572 = vld [vmem:[%s263 + $0x10] sm:$0xff]
        %v573 = vld [vmem:[%s263 + $0x18] sm:$0xff]
        %v574 = vld [vmem:[%s263 + $0x20] sm:$0xff]
        %v575 = vld [vmem:[%s263 + $0x28] sm:$0xff]
        %v576 = vld [vmem:[%s263 + $0x30] sm:$0xff]
        %v577 = vld [vmem:[%s263 + $0x38] sm:$0xff]
        %v578 = vld [vmem:[%s263 + $0x40] sm:$0xff]
        %v579 = vld [vmem:[%s263 + $0x48] sm:$0xff]
        %v580 = vld [vmem:[%s263 + $0x50] sm:$0xff]
        %v581 = vld [vmem:[%s263 + $0x58] sm:$0xff]
        %v582 = vld [vmem:[%s263 + $0x60] sm:$0xff]
        %v583 = vld [vmem:[%s263 + $0x68] sm:$0xff]
        %v584 = vld [vmem:[%s263 + $0x70] sm:$0xff]
        %v585 = vld [vmem:[%s263 + $0x78] sm:$0xff]
        %v586 = vlaneseq
        %v587 = vand.u32 %v586, 127
        %vm588 = vcmp.lt.s32.totalorder %v587, 8
        %589 = vset.pattern.permute.xlu0 0
        %590 = vperm.xlu0 %589, %v570
        %v591 = vpop.permute.xlu0 %590
        %592 = vset.pattern.permute.xlu0 0
        %593 = vperm.xlu0 %592, %v571
        %v594 = vpop.permute.xlu0 %593
        %595 = vset.pattern.permute.xlu0 0
        %596 = vperm.xlu0 %595, %v572
        %v597 = vpop.permute.xlu0 %596
        %598 = vset.pattern.permute.xlu0 0
        %599 = vperm.xlu0 %598, %v573
        %v600 = vpop.permute.xlu0 %599
        %601 = vset.pattern.permute.xlu0 0
        %602 = vperm.xlu0 %601, %v574
        %v603 = vpop.permute.xlu0 %602
        %604 = vset.pattern.permute.xlu0 0
        %605 = vperm.xlu0 %604, %v575
        %v606 = vpop.permute.xlu0 %605
        %607 = vset.pattern.permute.xlu0 0
        %608 = vperm.xlu0 %607, %v576
        %v609 = vpop.permute.xlu0 %608
        %610 = vset.pattern.permute.xlu0 0
        %611 = vperm.xlu0 %610, %v577
        %v612 = vpop.permute.xlu0 %611
        %613 = vset.pattern.permute.xlu0 0
        %614 = vperm.xlu0 %613, %v578
        %v615 = vpop.permute.xlu0 %614
        %616 = vset.pattern.permute.xlu0 0
        %617 = vperm.xlu0 %616, %v579
        %v618 = vpop.permute.xlu0 %617
        %619 = vset.pattern.permute.xlu0 0
        %620 = vperm.xlu0 %619, %v580
        %v621 = vpop.permute.xlu0 %620
        %622 = vset.pattern.permute.xlu0 0
        %623 = vperm.xlu0 %622, %v581
        %v624 = vpop.permute.xlu0 %623
        %625 = vset.pattern.permute.xlu0 0
        %626 = vperm.xlu0 %625, %v582
        %v627 = vpop.permute.xlu0 %626
        %628 = vset.pattern.permute.xlu0 0
        %629 = vperm.xlu0 %628, %v583
        %v630 = vpop.permute.xlu0 %629
        %631 = vset.pattern.permute.xlu0 0
        %632 = vperm.xlu0 %631, %v584
        %v633 = vpop.permute.xlu0 %632
        %634 = vset.pattern.permute.xlu0 0
        %635 = vperm.xlu0 %634, %v585
        %v636 = vpop.permute.xlu0 %635
        %vm637 = vcmp.eq.s32.totalorder %v587, %v591
        %vm638 = vcmp.eq.s32.totalorder %v587, %v594
        %vm639 = vcmp.eq.s32.totalorder %v587, %v597
        %vm640 = vcmp.eq.s32.totalorder %v587, %v600
        %vm641 = vcmp.eq.s32.totalorder %v587, %v603
        %vm642 = vcmp.eq.s32.totalorder %v587, %v606
        %vm643 = vcmp.eq.s32.totalorder %v587, %v609
        %vm644 = vcmp.eq.s32.totalorder %v587, %v612
        %vm645 = vcmp.eq.s32.totalorder %v587, %v615
        %vm646 = vcmp.eq.s32.totalorder %v587, %v618
        %vm647 = vcmp.eq.s32.totalorder %v587, %v621
        %vm648 = vcmp.eq.s32.totalorder %v587, %v624
        %vm649 = vcmp.eq.s32.totalorder %v587, %v627
        %vm650 = vcmp.eq.s32.totalorder %v587, %v630
        %vm651 = vcmp.eq.s32.totalorder %v587, %v633
        %vm652 = vcmp.eq.s32.totalorder %v587, %v636
        %vm653 = vmand %vm588, %vm637
        %vm654 = vmand %vm588, %vm638
        %vm655 = vmand %vm588, %vm639
        %vm656 = vmand %vm588, %vm640
        %vm657 = vmand %vm588, %vm641
        %vm658 = vmand %vm588, %vm642
        %vm659 = vmand %vm588, %vm643
        %vm660 = vmand %vm588, %vm644
        %vm661 = vmand %vm588, %vm645
        %vm662 = vmand %vm588, %vm646
        %vm663 = vmand %vm588, %vm647
        %vm664 = vmand %vm588, %vm648
        %vm665 = vmand %vm588, %vm649
        %vm666 = vmand %vm588, %vm650
        %vm667 = vmand %vm588, %vm651
        %vm668 = vmand %vm588, %vm652
        %vm669 = vmxor %vm588, 1
        %v670 = vsub.s32 %v587, 8
        %671 = vset.pattern.permute.xlu0 1
        %672 = vperm.xlu0 %671, %v570
        %v673 = vpop.permute.xlu0 %672
        %674 = vset.pattern.permute.xlu0 1
        %675 = vperm.xlu0 %674, %v571
        %v676 = vpop.permute.xlu0 %675
        %677 = vset.pattern.permute.xlu0 1
        %678 = vperm.xlu0 %677, %v572
        %v679 = vpop.permute.xlu0 %678
        %680 = vset.pattern.permute.xlu0 1
        %681 = vperm.xlu0 %680, %v573
        %v682 = vpop.permute.xlu0 %681
        %683 = vset.pattern.permute.xlu0 1
        %684 = vperm.xlu0 %683, %v574
        %v685 = vpop.permute.xlu0 %684
        %686 = vset.pattern.permute.xlu0 1
        %687 = vperm.xlu0 %686, %v575
        %v688 = vpop.permute.xlu0 %687
        %689 = vset.pattern.permute.xlu0 1
        %690 = vperm.xlu0 %689, %v576
        %v691 = vpop.permute.xlu0 %690
        %692 = vset.pattern.permute.xlu0 1
        %693 = vperm.xlu0 %692, %v577
        %v694 = vpop.permute.xlu0 %693
        %695 = vset.pattern.permute.xlu0 1
        %696 = vperm.xlu0 %695, %v578
        %v697 = vpop.permute.xlu0 %696
        %698 = vset.pattern.permute.xlu0 1
        %699 = vperm.xlu0 %698, %v579
        %v700 = vpop.permute.xlu0 %699
        %701 = vset.pattern.permute.xlu0 1
        %702 = vperm.xlu0 %701, %v580
        %v703 = vpop.permute.xlu0 %702
        %704 = vset.pattern.permute.xlu0 1
        %705 = vperm.xlu0 %704, %v581
        %v706 = vpop.permute.xlu0 %705
        %707 = vset.pattern.permute.xlu0 1
        %708 = vperm.xlu0 %707, %v582
        %v709 = vpop.permute.xlu0 %708
        %710 = vset.pattern.permute.xlu0 1
        %711 = vperm.xlu0 %710, %v583
        %v712 = vpop.permute.xlu0 %711
        %713 = vset.pattern.permute.xlu0 1
        %714 = vperm.xlu0 %713, %v584
        %v715 = vpop.permute.xlu0 %714
        %716 = vset.pattern.permute.xlu0 1
        %717 = vperm.xlu0 %716, %v585
        %v718 = vpop.permute.xlu0 %717
        %vm719 = vcmp.eq.s32.totalorder %v670, %v673
        %vm720 = vcmp.eq.s32.totalorder %v670, %v676
        %vm721 = vcmp.eq.s32.totalorder %v670, %v679
        %vm722 = vcmp.eq.s32.totalorder %v670, %v682
        %vm723 = vcmp.eq.s32.totalorder %v670, %v685
        %vm724 = vcmp.eq.s32.totalorder %v670, %v688
        %vm725 = vcmp.eq.s32.totalorder %v670, %v691
        %vm726 = vcmp.eq.s32.totalorder %v670, %v694
        %vm727 = vcmp.eq.s32.totalorder %v670, %v697
        %vm728 = vcmp.eq.s32.totalorder %v670, %v700
        %vm729 = vcmp.eq.s32.totalorder %v670, %v703
        %vm730 = vcmp.eq.s32.totalorder %v670, %v706
        %vm731 = vcmp.eq.s32.totalorder %v670, %v709
        %vm732 = vcmp.eq.s32.totalorder %v670, %v712
        %vm733 = vcmp.eq.s32.totalorder %v670, %v715
        %vm734 = vcmp.eq.s32.totalorder %v670, %v718
        %vm735 = vmand %vm669, %vm719
        %vm736 = vmand %vm669, %vm720
        %vm737 = vmand %vm669, %vm721
        %vm738 = vmand %vm669, %vm722
        %vm739 = vmand %vm669, %vm723
        %vm740 = vmand %vm669, %vm724
        %vm741 = vmand %vm669, %vm725
        %vm742 = vmand %vm669, %vm726
        %vm743 = vmand %vm669, %vm727
        %vm744 = vmand %vm669, %vm728
        %vm745 = vmand %vm669, %vm729
        %vm746 = vmand %vm669, %vm730
        %vm747 = vmand %vm669, %vm731
        %vm748 = vmand %vm669, %vm732
        %vm749 = vmand %vm669, %vm733
        %vm750 = vmand %vm669, %vm734
        %vm751 = vmor %vm653, %vm735
        %vm752 = vmor %vm654, %vm736
        %vm753 = vmor %vm655, %vm737
        %vm754 = vmor %vm656, %vm738
        %vm755 = vmor %vm657, %vm739
        %vm756 = vmor %vm658, %vm740
        %vm757 = vmor %vm659, %vm741
        %vm758 = vmor %vm660, %vm742
        %vm759 = vmor %vm661, %vm743
        %vm760 = vmor %vm662, %vm744
        %vm761 = vmor %vm663, %vm745
        %vm762 = vmor %vm664, %vm746
        %vm763 = vmor %vm665, %vm747
        %vm764 = vmor %vm666, %vm748
        %vm765 = vmor %vm667, %vm749
        %vm766 = vmor %vm668, %vm750
        %v767 = vsel %vm751, 1.0, 0.0
        %v768 = vsel %vm752, 1.0, 0.0
        %v769 = vsel %vm753, 1.0, 0.0
        %v770 = vsel %vm754, 1.0, 0.0
        %v771 = vsel %vm755, 1.0, 0.0
        %v772 = vsel %vm756, 1.0, 0.0
        %v773 = vsel %vm757, 1.0, 0.0
        %v774 = vsel %vm758, 1.0, 0.0
        %v775 = vsel %vm759, 1.0, 0.0
        %v776 = vsel %vm760, 1.0, 0.0
        %v777 = vsel %vm761, 1.0, 0.0
        %v778 = vsel %vm762, 1.0, 0.0
        %v779 = vsel %vm763, 1.0, 0.0
        %v780 = vsel %vm764, 1.0, 0.0
        %v781 = vsel %vm765, 1.0, 0.0
        %v782 = vsel %vm766, 1.0, 0.0
        %v783 = vpack.c.bf16 %v768, %v767
        %v784 = vpack.c.bf16 %v770, %v769
        %v785 = vpack.c.bf16 %v772, %v771
        %v786 = vpack.c.bf16 %v774, %v773
        %v787 = vpack.c.bf16 %v776, %v775
        %v788 = vpack.c.bf16 %v778, %v777
        %v789 = vpack.c.bf16 %v780, %v779
        %v790 = vpack.c.bf16 %v782, %v781
        %v791 = vld [vmem:[%s2] sm:$0xf]
        %v792 = vld [vmem:[%s2 + $0x4] sm:$0xf]
        %v795 = vunpack.c.l.b16 %v791
        %v796 = vunpack.c.l.b16 %v792
        %v797 = vpack.c.b16 %v796, %v795
        %vm799 = vcmask 130048
        %v801 = vsel %vm799, %v783, 0
        %v804 = vsel %vm799, %v784, 0
        %v807 = vsel %vm799, %v785, 0
        %v810 = vsel %vm799, %v786, 0
        %v813 = vsel %vm799, %v787, 0
        %v816 = vsel %vm799, %v788, 0
        %v819 = vsel %vm799, %v789, 0
        %v822 = vsel %vm799, %v790, 0
        %824 = vmatprep.subr.bf16.mxu0 0
        %825 = vmatpush1.bf16.msra.mxu0 %v797
        %826 = vmatprep.subr.bf16.mxu0 0
        %827 = vmatpush1.bf16.msra.mxu0 0
        %828 = vmatprep.subr.bf16.mxu0 0
        %829 = vmatpush1.bf16.msra.mxu0 0
        %830 = vmatprep.subr.bf16.mxu0 0
        %831 = vmatpush1.bf16.msra.mxu0 0
        %832 = vmatprep.subr.bf16.mxu0 0
        %833 = vmatpush1.bf16.msra.mxu0 0
        %834 = vmatprep.subr.bf16.mxu0 0
        %835 = vmatpush1.bf16.msra.mxu0 0
        %836 = vmatprep.subr.bf16.mxu0 0
        %837 = vmatpush1.bf16.msra.mxu0 0
        %838 = vmatprep.subr.bf16.mxu0 0
        %839 = vmatpush1.bf16.msra.mxu0 0
        %840 = vmatprep.subr.bf16.mxu0 0
        %841 = vmatpush1.bf16.msra.mxu0 0
        %842 = vmatprep.subr.bf16.mxu0 0
        %843 = vmatpush1.bf16.msra.mxu0 0
        %844 = vmatprep.subr.bf16.mxu0 0
        %845 = vmatpush1.bf16.msra.mxu0 0
        %846 = vmatprep.subr.bf16.mxu0 0
        %847 = vmatpush1.bf16.msra.mxu0 0
        %848 = vmatprep.subr.bf16.mxu0 0
        %849 = vmatpush1.bf16.msra.mxu0 0
        %850 = vmatprep.subr.bf16.mxu0 0
        %851 = vmatpush1.bf16.msra.mxu0 0
        %852 = vmatprep.subr.bf16.mxu0 0
        %853 = vmatpush1.bf16.msra.mxu0 0
        %854 = vmatprep.subr.bf16.mxu0 0
        %855 = vmatpush1.bf16.msra.mxu0 0
        %856 = vmatprep.mubr.bf16.mxu0 0
        %857 = vmatmul.mubr.bf16.gmra.mrb[0].mxu0 %v801
        %v858 = vpop.f32.mrb[0].mxu0
        %v859 = vadd.f32 0.0, %v858
        %v860 = vpop.f32.mrb[0].mxu0
        %v861 = vpop.f32.mrb[0].mxu0
        %v862 = vadd.f32 0.0, %v861
        %v863 = vpop.f32.mrb[0].mxu0
        %864 = vmatprep.mubr.bf16.mxu0 0
        %865 = vmatmul.mubr.bf16.gmra.mrb[0].mxu0 %v804
        %v866 = vpop.f32.mrb[0].mxu0
        %v867 = vadd.f32 0.0, %v866
        %v868 = vpop.f32.mrb[0].mxu0
        %v869 = vpop.f32.mrb[0].mxu0
        %v870 = vadd.f32 0.0, %v869
        %v871 = vpop.f32.mrb[0].mxu0
        %872 = vmatprep.mubr.bf16.mxu0 0
        %873 = vmatmul.mubr.bf16.gmra.mrb[0].mxu0 %v807
        %v874 = vpop.f32.mrb[0].mxu0
        %v875 = vadd.f32 0.0, %v874
        %v876 = vpop.f32.mrb[0].mxu0
        %v877 = vpop.f32.mrb[0].mxu0
        %v878 = vadd.f32 0.0, %v877
        %v879 = vpop.f32.mrb[0].mxu0
        %880 = vmatprep.mubr.bf16.mxu0 0
        %881 = vmatmul.mubr.bf16.gmra.mrb[0].mxu0 %v810
        %v882 = vpop.f32.mrb[0].mxu0
        %v883 = vadd.f32 0.0, %v882
        %v884 = vpop.f32.mrb[0].mxu0
        %v885 = vpop.f32.mrb[0].mxu0
        %v886 = vadd.f32 0.0, %v885
        %v887 = vpop.f32.mrb[0].mxu0
        %888 = vmatprep.mubr.bf16.mxu0 0
        %889 = vmatmul.mubr.bf16.gmra.mrb[0].mxu0 %v813
        %v890 = vpop.f32.mrb[0].mxu0
        %v891 = vadd.f32 0.0, %v890
        %v892 = vpop.f32.mrb[0].mxu0
        %v893 = vpop.f32.mrb[0].mxu0
        %v894 = vadd.f32 0.0, %v893
        %v895 = vpop.f32.mrb[0].mxu0
        %896 = vmatprep.mubr.bf16.mxu0 0
        %897 = vmatmul.mubr.bf16.gmra.mrb[0].mxu0 %v816
        %v898 = vpop.f32.mrb[0].mxu0
        %v899 = vadd.f32 0.0, %v898
        %v900 = vpop.f32.mrb[0].mxu0
        %v901 = vpop.f32.mrb[0].mxu0
        %v902 = vadd.f32 0.0, %v901
        %v903 = vpop.f32.mrb[0].mxu0
        %904 = vmatprep.mubr.bf16.mxu0 0
        %905 = vmatmul.mubr.bf16.gmra.mrb[0].mxu0 %v819
        %v906 = vpop.f32.mrb[0].mxu0
        %v907 = vadd.f32 0.0, %v906
        %v908 = vpop.f32.mrb[0].mxu0
        %v909 = vpop.f32.mrb[0].mxu0
        %v910 = vadd.f32 0.0, %v909
        %v911 = vpop.f32.mrb[0].mxu0
        %912 = vmatprep.mubr.bf16.mxu0 0
        %913 = vmatmul.mubr.bf16.gmra.mrb[0].mxu0 %v822
        %v914 = vpop.f32.mrb[0].mxu0
        %v915 = vadd.f32 0.0, %v914
        %v916 = vpop.f32.mrb[0].mxu0
        %v917 = vpop.f32.mrb[0].mxu0
        %v918 = vadd.f32 0.0, %v917
        %v919 = vpop.f32.mrb[0].mxu0
        %920 = vdwg.mxu0
        %v921 = vadd.f32 %v554, %v859
        %v922 = vadd.f32 %v555, %v862
        %v923 = vadd.f32 %v556, %v867
        %v924 = vadd.f32 %v557, %v870
        %v925 = vadd.f32 %v558, %v875
        %v926 = vadd.f32 %v559, %v878
        %v927 = vadd.f32 %v560, %v883
        %v928 = vadd.f32 %v561, %v886
        %v929 = vadd.f32 %v562, %v891
        %v930 = vadd.f32 %v563, %v894
        %v931 = vadd.f32 %v564, %v899
        %v932 = vadd.f32 %v565, %v902
        %v933 = vadd.f32 %v566, %v907
        %v934 = vadd.f32 %v567, %v910
        %v935 = vadd.f32 %v568, %v915
        %v936 = vadd.f32 %v569, %v918
        %937 = vst [vmem:[%s254] sm:$0xff] %v921
        %938 = vst [vmem:[%s254 + $0x8] sm:$0xff] %v922
        %939 = vst [vmem:[%s254 + $0x10] sm:$0xff] %v923
        %940 = vst [vmem:[%s254 + $0x18] sm:$0xff] %v924
        %941 = vst [vmem:[%s254 + $0x20] sm:$0xff] %v925
        %942 = vst [vmem:[%s254 + $0x28] sm:$0xff] %v926
        %943 = vst [vmem:[%s254 + $0x30] sm:$0xff] %v927
        %944 = vst [vmem:[%s254 + $0x38] sm:$0xff] %v928
        %945 = vst [vmem:[%s254 + $0x40] sm:$0xff] %v929
        %946 = vst [vmem:[%s254 + $0x48] sm:$0xff] %v930
        %947 = vst [vmem:[%s254 + $0x50] sm:$0xff] %v931
        %948 = vst [vmem:[%s254 + $0x58] sm:$0xff] %v932
        %949 = vst [vmem:[%s254 + $0x60] sm:$0xff] %v933
        %950 = vst [vmem:[%s254 + $0x68] sm:$0xff] %v934
        %951 = vst [vmem:[%s254 + $0x70] sm:$0xff] %v935
        %952 = vst [vmem:[%s254 + $0x78] sm:$0xff] %v936
        %s953 = sand.u32 %s139, 1
        %s954 = sand.u32 %s139, 1
        %s955 = smul.addr %s954, 128
        %s956 = scalar_lea.vmem [#allocation2], %s955
        // Predicated region
        $region41: #{feature_merge.1} parent=39 // pred_check
          %p957 = pneg %p149
        $region42: #{feature_merge.1} parent=39 // pred_check_branch
          %959 = sbr.rel (%p957) target = $region44
        $region43: #{feature_merge.1} parent=39 // pred_region
          %s960 = smul.u32 16, %s16
          %s961 = ssub.s32 63, %s960
          %p962 = scmp.lt.s32.totalorder %s961, 16
          %s963 = scalar_select %p962, %s961, 16
          %s964 = smul.u32 128, %s963
          %p965 = scmp.ne.s32.totalorder 0, %s964
          %s966 = smul.addr %s960, 8
          %s967 = scalar_lea.vmem %s5, %s966
          // Predicated region
          $region45: #{feature_merge.1} parent=43 // pred_check
            %p968 = pneg %p965
          $region46: #{feature_merge.1} parent=43 // pred_check_branch
            %970 = sbr.rel (%p968) target = $region48
          $region47: #{feature_merge.1} parent=43 // pred_region
            // Predicated region
            $region49: #{feature_merge.1} parent=47 // pred_check
              _
            $region50: #{feature_merge.1} parent=47 // pred_check_branch
              %972 = sbr.rel (0) target = $region52
            $region51: #{feature_merge.1} parent=47 // pred_region
              // Predicated region
              $region71: #{feature_merge.1} parent=51 // pred_check
                _
              $region72: #{feature_merge.1} parent=51 // pred_check_branch
                %1051 = sbr.rel (0) target = $region74
              $region73: #{feature_merge.1} parent=51 // pred_region
                %s1052 = sshrl.u32 %s963, 4
                // While loop
                $region75: #{feature_merge.1} parent=73 // loop_pre_header
                  _
                $region76: #{feature_merge.1} parent=73 // loop_header
                  %s1054 = sphi 0, %s1056
                  %p1055 = scmp.ge.s32.totalorder %s1054, %s1052
                  %s1059 = sphi 0, %s1096
                  %s1060 = sphi %s956, %s1099
                  %s1061 = sphi %s967, %s1100
                $region77: #{feature_merge.1} parent=73 // loop_header_branch
                  %1058 = sbr.rel (%p1055) target = $region81
                $region78: #{feature_merge.1} parent=73 // loop_body
                  %v1062 = vld [vmem:[%s1060] sm:$0xff]
                  %1063 = vst [vmem:[%s1061] sm:$0xff] %v1062
                  %v1064 = vld [vmem:[%s1060 + $0x8] sm:$0xff]
                  %1065 = vst [vmem:[%s1061 + $0x8] sm:$0xff] %v1064
                  %v1066 = vld [vmem:[%s1060 + $0x10] sm:$0xff]
                  %1067 = vst [vmem:[%s1061 + $0x10] sm:$0xff] %v1066
                  %v1068 = vld [vmem:[%s1060 + $0x18] sm:$0xff]
                  %1069 = vst [vmem:[%s1061 + $0x18] sm:$0xff] %v1068
                  %v1070 = vld [vmem:[%s1060 + $0x20] sm:$0xff]
                  %1071 = vst [vmem:[%s1061 + $0x20] sm:$0xff] %v1070
                  %v1072 = vld [vmem:[%s1060 + $0x28] sm:$0xff]
                  %1073 = vst [vmem:[%s1061 + $0x28] sm:$0xff] %v1072
                  %v1074 = vld [vmem:[%s1060 + $0x30] sm:$0xff]
                  %1075 = vst [vmem:[%s1061 + $0x30] sm:$0xff] %v1074
                  %v1076 = vld [vmem:[%s1060 + $0x38] sm:$0xff]
                  %1077 = vst [vmem:[%s1061 + $0x38] sm:$0xff] %v1076
                  %v1078 = vld [vmem:[%s1060 + $0x40] sm:$0xff]
                  %1079 = vst [vmem:[%s1061 + $0x40] sm:$0xff] %v1078
                  %v1080 = vld [vmem:[%s1060 + $0x48] sm:$0xff]
                  %1081 = vst [vmem:[%s1061 + $0x48] sm:$0xff] %v1080
                  %v1082 = vld [vmem:[%s1060 + $0x50] sm:$0xff]
                  %1083 = vst [vmem:[%s1061 + $0x50] sm:$0xff] %v1082
                  %v1084 = vld [vmem:[%s1060 + $0x58] sm:$0xff]
                  %1085 = vst [vmem:[%s1061 + $0x58] sm:$0xff] %v1084
                  %v1086 = vld [vmem:[%s1060 + $0x60] sm:$0xff]
                  %1087 = vst [vmem:[%s1061 + $0x60] sm:$0xff] %v1086
                  %v1088 = vld [vmem:[%s1060 + $0x68] sm:$0xff]
                  %1089 = vst [vmem:[%s1061 + $0x68] sm:$0xff] %v1088
                  %v1090 = vld [vmem:[%s1060 + $0x70] sm:$0xff]
                  %1091 = vst [vmem:[%s1061 + $0x70] sm:$0xff] %v1090
                  %v1092 = vld [vmem:[%s1060 + $0x78] sm:$0xff]
                  %1093 = vst [vmem:[%s1061 + $0x78] sm:$0xff] %v1092
                  %s1094 = sadd.s32 1, %s1059
                  %p1095 = scmp.ge.s32.totalorder %s1094, %s1052
                  %s1096 = scalar_select %p1095, 0, %s1094
                  %s1097 = smul.u32 %s1096, 128
                  %s1098 = smul.u32 %s1096, 128
                  %s1099 = scalar_lea.vmem %s956, %s1097 [#allocation2]
                  %s1100 = scalar_lea.vmem %s967, %s1098
                $region79: #{feature_merge.1} parent=73 // loop_footer
                  %s1056 = sadd.s32 %s1054, 1
                $region80: #{feature_merge.1} parent=73 // loop_footer_branch
                  %1053 = sbr.rel target = $region76
                $region81: #{feature_merge.1} parent=73 // loop_exit
                  _
                %s1101 = sshrl.u32 %s963, 4
                %s1102 = sand.u32 %s963, 15
                %s1103 = smul.u32 %s1101, 16
                %s1104 = smul.u32 8, %s1103
                %s1105 = scalar_lea.vmem %s956, %s1104 [#allocation2]
                %s1106 = smul.u32 8, %s1103
                %s1107 = scalar_lea.vmem %s967, %s1106
                // While loop
                $region82: #{feature_merge.1} parent=73 // loop_pre_header
                  _
                $region83: #{feature_merge.1} parent=73 // loop_header
                  %s1109 = sphi 0, %s1111
                  %p1110 = scmp.ge.s32.totalorder %s1109, %s1102
                  %s1114 = sphi 0, %s1121
                  %s1115 = sphi %s1105, %s1124
                  %s1116 = sphi %s1107, %s1125
                $region84: #{feature_merge.1} parent=73 // loop_header_branch
                  %1113 = sbr.rel (%p1110) target = $region88
                $region85: #{feature_merge.1} parent=73 // loop_body
                  %v1117 = vld [vmem:[%s1115] sm:$0xff]
                  %1118 = vst [vmem:[%s1116] sm:$0xff] %v1117
                  %s1119 = sadd.s32 1, %s1114
                  %p1120 = scmp.ge.s32.totalorder %s1119, %s1102
                  %s1121 = scalar_select %p1120, 0, %s1119
                  %s1122 = smul.u32 %s1121, 8
                  %s1123 = smul.u32 %s1121, 8
                  %s1124 = scalar_lea.vmem %s1105, %s1122 [#allocation2]
                  %s1125 = scalar_lea.vmem %s1107, %s1123
                $region86: #{feature_merge.1} parent=73 // loop_footer
                  %s1111 = sadd.s32 %s1109, 1
                $region87: #{feature_merge.1} parent=73 // loop_footer_branch
                  %1108 = sbr.rel target = $region83
                $region88: #{feature_merge.1} parent=73 // loop_exit
                  _
              $region74: #{feature_merge.1} parent=51 // pred_fallthru
                _
              // Predicated region
              $region89: #{feature_merge.1} parent=51 // pred_check
                _
              $region90: #{feature_merge.1} parent=51 // pred_check_branch
                %1127 = sbr.rel target = $region92
              $region91: #{feature_merge.1} parent=51 // pred_region
                _
              $region92: #{feature_merge.1} parent=51 // pred_fallthru
                _
            $region52: #{feature_merge.1} parent=47 // pred_fallthru
              _
            // Predicated region
            $region53: #{feature_merge.1} parent=47 // pred_check
              _
            $region54: #{feature_merge.1} parent=47 // pred_check_branch
              %974 = sbr.rel target = $region56
            $region55: #{feature_merge.1} parent=47 // pred_region
              %s976 = sshrl.u32 %s963, 4
              // While loop
              $region57: #{feature_merge.1} parent=55 // loop_pre_header
                _
              $region58: #{feature_merge.1} parent=55 // loop_header
                %s978 = sphi 0, %s980
                %p979 = scmp.ge.s32.totalorder %s978, %s976
                %s983 = sphi 0, %s1020
                %s984 = sphi %s956, %s1023
                %s985 = sphi %s967, %s1024
              $region59: #{feature_merge.1} parent=55 // loop_header_branch
                %982 = sbr.rel (%p979) target = $region63
              $region60: #{feature_merge.1} parent=55 // loop_body
                %v986 = vld [vmem:[%s984] sm:$0xff]
                %987 = vst [vmem:[%s985] sm:$0xff] %v986
                %v988 = vld [vmem:[%s984 + $0x8] sm:$0xff]
                %989 = vst [vmem:[%s985 + $0x8] sm:$0xff] %v988
                %v990 = vld [vmem:[%s984 + $0x10] sm:$0xff]
                %991 = vst [vmem:[%s985 + $0x10] sm:$0xff] %v990
                %v992 = vld [vmem:[%s984 + $0x18] sm:$0xff]
                %993 = vst [vmem:[%s985 + $0x18] sm:$0xff] %v992
                %v994 = vld [vmem:[%s984 + $0x20] sm:$0xff]
                %995 = vst [vmem:[%s985 + $0x20] sm:$0xff] %v994
                %v996 = vld [vmem:[%s984 + $0x28] sm:$0xff]
                %997 = vst [vmem:[%s985 + $0x28] sm:$0xff] %v996
                %v998 = vld [vmem:[%s984 + $0x30] sm:$0xff]
                %999 = vst [vmem:[%s985 + $0x30] sm:$0xff] %v998
                %v1000 = vld [vmem:[%s984 + $0x38] sm:$0xff]
                %1001 = vst [vmem:[%s985 + $0x38] sm:$0xff] %v1000
                %v1002 = vld [vmem:[%s984 + $0x40] sm:$0xff]
                %1003 = vst [vmem:[%s985 + $0x40] sm:$0xff] %v1002
                %v1004 = vld [vmem:[%s984 + $0x48] sm:$0xff]
                %1005 = vst [vmem:[%s985 + $0x48] sm:$0xff] %v1004
                %v1006 = vld [vmem:[%s984 + $0x50] sm:$0xff]
                %1007 = vst [vmem:[%s985 + $0x50] sm:$0xff] %v1006
                %v1008 = vld [vmem:[%s984 + $0x58] sm:$0xff]
                %1009 = vst [vmem:[%s985 + $0x58] sm:$0xff] %v1008
                %v1010 = vld [vmem:[%s984 + $0x60] sm:$0xff]
                %1011 = vst [vmem:[%s985 + $0x60] sm:$0xff] %v1010
                %v1012 = vld [vmem:[%s984 + $0x68] sm:$0xff]
                %1013 = vst [vmem:[%s985 + $0x68] sm:$0xff] %v1012
                %v1014 = vld [vmem:[%s984 + $0x70] sm:$0xff]
                %1015 = vst [vmem:[%s985 + $0x70] sm:$0xff] %v1014
                %v1016 = vld [vmem:[%s984 + $0x78] sm:$0xff]
                %1017 = vst [vmem:[%s985 + $0x78] sm:$0xff] %v1016
                %s1018 = sadd.s32 1, %s983
                %p1019 = scmp.ge.s32.totalorder %s1018, %s976
                %s1020 = scalar_select %p1019, 0, %s1018
                %s1021 = smul.u32 %s1020, 128
                %s1022 = smul.u32 %s1020, 128
                %s1023 = scalar_lea.vmem %s956, %s1021 [#allocation2]
                %s1024 = scalar_lea.vmem %s967, %s1022
              $region61: #{feature_merge.1} parent=55 // loop_footer
                %s980 = sadd.s32 %s978, 1
              $region62: #{feature_merge.1} parent=55 // loop_footer_branch
                %977 = sbr.rel target = $region58
              $region63: #{feature_merge.1} parent=55 // loop_exit
                _
              %s1025 = sshrl.u32 %s963, 4
              %s1026 = sand.u32 %s963, 15
              %s1027 = smul.u32 %s1025, 16
              %s1028 = smul.u32 8, %s1027
              %s1029 = scalar_lea.vmem %s956, %s1028 [#allocation2]
              %s1030 = smul.u32 8, %s1027
              %s1031 = scalar_lea.vmem %s967, %s1030
              // While loop
              $region64: #{feature_merge.1} parent=55 // loop_pre_header
                _
              $region65: #{feature_merge.1} parent=55 // loop_header
                %s1033 = sphi 0, %s1035
                %p1034 = scmp.ge.s32.totalorder %s1033, %s1026
                %s1038 = sphi 0, %s1045
                %s1039 = sphi %s1029, %s1048
                %s1040 = sphi %s1031, %s1049
              $region66: #{feature_merge.1} parent=55 // loop_header_branch
                %1037 = sbr.rel (%p1034) target = $region70
              $region67: #{feature_merge.1} parent=55 // loop_body
                %v1041 = vld [vmem:[%s1039] sm:$0xff]
                %1042 = vst [vmem:[%s1040] sm:$0xff] %v1041
                %s1043 = sadd.s32 1, %s1038
                %p1044 = scmp.ge.s32.totalorder %s1043, %s1026
                %s1045 = scalar_select %p1044, 0, %s1043
                %s1046 = smul.u32 %s1045, 8
                %s1047 = smul.u32 %s1045, 8
                %s1048 = scalar_lea.vmem %s1029, %s1046 [#allocation2]
                %s1049 = scalar_lea.vmem %s1031, %s1047
              $region68: #{feature_merge.1} parent=55 // loop_footer
                %s1035 = sadd.s32 %s1033, 1
              $region69: #{feature_merge.1} parent=55 // loop_footer_branch
                %1032 = sbr.rel target = $region65
              $region70: #{feature_merge.1} parent=55 // loop_exit
                _
            $region56: #{feature_merge.1} parent=47 // pred_fallthru
              _
          $region48: #{feature_merge.1} parent=43 // pred_fallthru
            _
          %1128 = vnop
        $region44: #{feature_merge.1} parent=39 // pred_fallthru
          _
      $region40: #{feature_merge.1} parent=5 // pred_fallthru
        _
      %p1129 = scmp.le.s32.totalorder 2, %s11
      // Predicated region
      $region93: #{feature_merge.1} parent=5 // pred_check
        %p1130 = pneg %p1129
      $region94: #{feature_merge.1} parent=5 // pred_check_branch
        %1132 = sbr.rel (%p1130) target = $region96
      $region95: #{feature_merge.1} parent=5 // pred_region
        %s1133 = ssub.s32 %s11, 2
        // Predicated region
        $region97: #{feature_merge.1} parent=95 // pred_check
          %p1134 = pneg %p155
        $region98: #{feature_merge.1} parent=95 // pred_check_branch
          %1136 = sbr.rel (%p1134) target = $region100
        $region99: #{feature_merge.1} parent=95 // pred_region
          %s1137 = sand.u32 %s140, 1
          %s1138 = sand.u32 %s140, 1
          %s1139 = smul.addr %s1138, 128
          %s1140 = scalar_lea.vmem [#allocation2], %s1139
        $region100: #{feature_merge.1} parent=95 // pred_fallthru
          _
      $region96: #{feature_merge.1} parent=5 // pred_fallthru
        _
    $region6: #{feature_merge.1} parent=1 // loop_footer
      %s15 = sadd.s32 1, %s11
    $region7: #{feature_merge.1} parent=1 // loop_footer_branch
      %10 = sbr.rel target = $region3
    $region8: #{feature_merge.1} parent=1 // loop_exit
      _

</llo_original>
